<compile_context>
chip_gen: v7x
topology: tpu7x:2x2x1
jax: 0.10.0
libtpu: 0.0.40
codegen_flags: <defaults>
</compile_context>

<pallas_src>
import jax
import jax.numpy as jnp
from jax.experimental import pallas as pl
from jax.experimental.pallas import tpu as pltpu


def film_kernel(x_ref, a_ref, ww_ref, bw_ref, wb_ref, bb_ref, o_ref):
    tile_n = x_ref.shape[0]
    num_actions = ww_ref.shape[0]

    # Build the one-hot encoding in-kernel: [tile_n, num_actions] f32.
    lane_ids = jax.lax.broadcasted_iota(jnp.int32, (tile_n, num_actions), 1)
    one_hot = (lane_ids == a_ref[...]).astype(jnp.float32)   # a_ref is [tile_n, 1]

    # Two Linear(A, F) layers on the (resident) transposed weight tables.
    w = jnp.dot(one_hot, ww_ref[...], preferred_element_type=jnp.float32)
    w = w + bw_ref[...]                                      # b_w is [1, F]
    b = jnp.dot(one_hot, wb_ref[...], preferred_element_type=jnp.float32)
    b = b + bb_ref[...]                                      # b_b is [1, F]

    # FiLM modulation + ReLU, f32 elementwise (v5e-friendly), lane-dense store.
    out = jnp.maximum(x_ref[...] * w + b, 0.0)
    o_ref[...] = out.astype(o_ref.dtype)


def film(state_emb, action, W_w, b_w, W_b, b_b, *, tile_n=512):
    """FiLM forward.

    state_emb: [N, F] f32 (F = out_features, 128 in the module)
    action:    [N] int  (values in [0, num_actions))
    W_w, W_b:  [F, A] f32  (PyTorch Linear convention: [out_features, in_features])
    b_w, b_b:  [F]    f32
    returns:   [N, F] f32
    """
    N, F = state_emb.shape
    A = W_w.shape[1]

    # Large batch tiles amortize per-grid-step overhead; clamp to N for small N.
    tile_n = min(tile_n, N)

    # Kernel-friendly layouts: weights pre-transposed to [A, F], biases as [1, F],
    # action as an int32 column so it rides a normal VMEM block.
    ww_t = W_w.T
    wb_t = W_b.T
    bw_2d = b_w.reshape(1, F)
    bb_2d = b_b.reshape(1, F)
    a_col = action.reshape(N, 1).astype(jnp.int32)

    grid = (pl.cdiv(N, tile_n),)
    return pl.pallas_call(
        film_kernel,
        out_shape=jax.ShapeDtypeStruct((N, F), state_emb.dtype),
        grid_spec=pltpu.PrefetchScalarGridSpec(
            num_scalar_prefetch=0,
            grid=grid,
            in_specs=[
                pl.BlockSpec((tile_n, F), lambda i: (i, 0)),   # state_emb tile
                pl.BlockSpec((tile_n, 1), lambda i: (i, 0)),   # action column tile
                pl.BlockSpec((A, F), lambda i: (0, 0)),        # W_w^T (resident)
                pl.BlockSpec((1, F), lambda i: (0, 0)),        # b_w
                pl.BlockSpec((A, F), lambda i: (0, 0)),        # W_b^T (resident)
                pl.BlockSpec((1, F), lambda i: (0, 0)),        # b_b
            ],
            out_specs=pl.BlockSpec((tile_n, F), lambda i: (i, 0)),
        ),
        compiler_params=pltpu.CompilerParams(
            dimension_semantics=("parallel",)
        ),
    )(state_emb, a_col, ww_t, bw_2d, wb_t, bb_2d)


if __name__ == "__main__":
    # Small, module-consistent shapes: state_emb is [bs, 128] per the docstring.
    num_actions = 8
    out_features = 128
    N = 16          # batch; with tile_n=8 the grid has 2 steps (both v7x TCs busy)

    key = jax.random.PRNGKey(0)
    k_x, k_a, k_w1, k_b1, k_w2, k_b2 = jax.random.split(key, 6)

    state_emb = jax.random.normal(k_x, (N, out_features), dtype=jnp.float32)
    action = jax.random.randint(k_a, (N,), 0, num_actions, dtype=jnp.int32)

    # Synthetic parameters following initialize_parameters (unit-row-norm weights);
    # biases are made nonzero so the bias path of the kernel is actually exercised.
    W_w = jax.random.normal(k_w1, (out_features, num_actions), dtype=jnp.float32)
    W_w = W_w / jnp.sqrt(jnp.sum(W_w ** 2, axis=1, keepdims=True))
    b_w = jax.random.normal(k_b1, (out_features,), dtype=jnp.float32) * 0.1
    W_b = jax.random.normal(k_w2, (out_features, num_actions), dtype=jnp.float32)
    W_b = W_b / jnp.sqrt(jnp.sum(W_b ** 2, axis=1, keepdims=True))
    b_b = jax.random.normal(k_b2, (out_features,), dtype=jnp.float32) * 0.1

    out = film(state_emb, action, W_w, b_w, W_b, b_b, tile_n=8)
    out = jax.block_until_ready(out)

    # Pure-JAX reference (same math as the PyTorch module).
    one_hot = jax.nn.one_hot(action, num_actions, dtype=jnp.float32)
    weight_ref = one_hot @ W_w.T + b_w
    bias_ref = one_hot @ W_b.T + b_b
    ref = jnp.maximum(state_emb * weight_ref + bias_ref, 0.0)

    assert out.shape == (N, out_features)
    assert jnp.allclose(out, ref, atol=1e-5, rtol=1e-5)

    print("KERNEL_OK")
</pallas_src>

<mosaic_0001>
module attributes {stable_mosaic.version = 11 : i64} {
  func.func @film_kernel(%arg0: i32, %arg1: memref<8x128xf32, #tpu.memory_space<vmem>>, %arg2: memref<8x1xi32, #tpu.memory_space<vmem>>, %arg3: memref<8x128xf32, #tpu.memory_space<vmem>>, %arg4: memref<1x128xf32, #tpu.memory_space<vmem>>, %arg5: memref<8x128xf32, #tpu.memory_space<vmem>>, %arg6: memref<1x128xf32, #tpu.memory_space<vmem>>, %arg7: memref<8x128xf32, #tpu.memory_space<vmem>>) attributes {dimension_semantics = [#tpu.dimension_semantics<parallel>], iteration_bounds = array<i64: 2>, scalar_prefetch = 0 : i64, scratch_operands = 0 : i64, tpu.core_type = #tpu.core_type<tc>, window_params = [{transform_indices = @transform_0, window_bounds = array<i64: 8, 128>}, {transform_indices = @transform_1, window_bounds = array<i64: 8, 1>}, {pipeline_mode = #tpu.pipeline_mode<synchronous>, transform_indices = @transform_2, window_bounds = array<i64: 8, 128>}, {pipeline_mode = #tpu.pipeline_mode<synchronous>, transform_indices = @transform_3, window_bounds = array<i64: 1, 128>}, {pipeline_mode = #tpu.pipeline_mode<synchronous>, transform_indices = @transform_4, window_bounds = array<i64: 8, 128>}, {pipeline_mode = #tpu.pipeline_mode<synchronous>, transform_indices = @transform_5, window_bounds = array<i64: 1, 128>}, {transform_indices = @transform_6, window_bounds = array<i64: 8, 128>}]} {
    %0 = tpu.iota {dimensions = array<i32: 1>} : vector<8x8xi32>
    %c0 = arith.constant 0 : index
    %c0_0 = arith.constant 0 : index
    %1 = vector.load %arg2[%c0, %c0_0] : memref<8x1xi32, #tpu.memory_space<vmem>>, vector<8x1xi32>
    %2 = vector.broadcast %1 : vector<8x1xi32> to vector<8x8xi32>
    %3 = arith.cmpi eq, %0, %2 : vector<8x8xi32>
    %4 = arith.extui %3 : vector<8x8xi1> to vector<8x8xi32>
    %5 = arith.sitofp %4 : vector<8x8xi32> to vector<8x8xf32>
    %c0_1 = arith.constant 0 : index
    %c0_2 = arith.constant 0 : index
    %6 = vector.load %arg3[%c0_1, %c0_2] : memref<8x128xf32, #tpu.memory_space<vmem>>, vector<8x128xf32>
    %cst = arith.constant dense<0.000000e+00> : vector<8x128xf32>
    %7 = tpu.matmul %5, %6, %cst {dimension_numbers = #tpu.dot_dimension_numbers<[1], [0], [0], [1], [0, 0, 1, 1], [], []>} : vector<8x8xf32>, vector<8x128xf32>, vector<8x128xf32> -> vector<8x128xf32>
    %c0_3 = arith.constant 0 : index
    %c0_4 = arith.constant 0 : index
    %8 = vector.load %arg4[%c0_3, %c0_4] : memref<1x128xf32, #tpu.memory_space<vmem>>, vector<1x128xf32>
    %9 = vector.broadcast %8 : vector<1x128xf32> to vector<8x128xf32>
    %10 = arith.addf %7, %9 : vector<8x128xf32>
    %c0_5 = arith.constant 0 : index
    %c0_6 = arith.constant 0 : index
    %11 = vector.load %arg5[%c0_5, %c0_6] : memref<8x128xf32, #tpu.memory_space<vmem>>, vector<8x128xf32>
    %cst_7 = arith.constant dense<0.000000e+00> : vector<8x128xf32>
    %12 = tpu.matmul %5, %11, %cst_7 {dimension_numbers = #tpu.dot_dimension_numbers<[1], [0], [0], [1], [0, 0, 1, 1], [], []>} : vector<8x8xf32>, vector<8x128xf32>, vector<8x128xf32> -> vector<8x128xf32>
    %c0_8 = arith.constant 0 : index
    %c0_9 = arith.constant 0 : index
    %13 = vector.load %arg6[%c0_8, %c0_9] : memref<1x128xf32, #tpu.memory_space<vmem>>, vector<1x128xf32>
    %14 = vector.broadcast %13 : vector<1x128xf32> to vector<8x128xf32>
    %15 = arith.addf %12, %14 : vector<8x128xf32>
    %c0_10 = arith.constant 0 : index
    %c0_11 = arith.constant 0 : index
    %16 = vector.load %arg1[%c0_10, %c0_11] : memref<8x128xf32, #tpu.memory_space<vmem>>, vector<8x128xf32>
    %17 = arith.mulf %16, %10 : vector<8x128xf32>
    %18 = arith.addf %17, %15 : vector<8x128xf32>
    %cst_12 = arith.constant 0.000000e+00 : f32
    %19 = vector.broadcast %cst_12 : f32 to vector<8x128xf32>
    %20 = arith.maximumf %18, %19 : vector<8x128xf32>
    %c0_13 = arith.constant 0 : index
    %c0_14 = arith.constant 0 : index
    %21 = vector.load %arg7[%c0_13, %c0_14] : memref<8x128xf32, #tpu.memory_space<vmem>>, vector<8x128xf32>
    tpu.vector_store %arg7[%c0_13, %c0_14], %20 {strides = array<i32>} : memref<8x128xf32, #tpu.memory_space<vmem>>, vector<8x128xf32>,
    return
  }
  func.func @transform_0(%arg0: i32) -> (i32, i32) {
    %c0_i32 = arith.constant 0 : i32
    %c0_i32_0 = arith.constant 0 : i32
    return %arg0, %c0_i32 : i32, i32
  }
  func.func @transform_1(%arg0: i32) -> (i32, i32) {
    %c0_i32 = arith.constant 0 : i32
    %c0_i32_0 = arith.constant 0 : i32
    return %arg0, %c0_i32 : i32, i32
  }
  func.func @transform_2(%arg0: i32) -> (i32, i32) {
    %c0_i32 = arith.constant 0 : i32
    %c0_i32_0 = arith.constant 0 : i32
    %c0_i32_1 = arith.constant 0 : i32
    return %c0_i32, %c0_i32_0 : i32, i32
  }
  func.func @transform_3(%arg0: i32) -> (i32, i32) {
    %c0_i32 = arith.constant 0 : i32
    %c0_i32_0 = arith.constant 0 : i32
    %c0_i32_1 = arith.constant 0 : i32
    return %c0_i32, %c0_i32_0 : i32, i32
  }
  func.func @transform_4(%arg0: i32) -> (i32, i32) {
    %c0_i32 = arith.constant 0 : i32
    %c0_i32_0 = arith.constant 0 : i32
    %c0_i32_1 = arith.constant 0 : i32
    return %c0_i32, %c0_i32_0 : i32, i32
  }
  func.func @transform_5(%arg0: i32) -> (i32, i32) {
    %c0_i32 = arith.constant 0 : i32
    %c0_i32_0 = arith.constant 0 : i32
    %c0_i32_1 = arith.constant 0 : i32
    return %c0_i32, %c0_i32_0 : i32, i32
  }
  func.func @transform_6(%arg0: i32) -> (i32, i32) {
    %c0_i32 = arith.constant 0 : i32
    %c0_i32_0 = arith.constant 0 : i32
    return %arg0, %c0_i32 : i32, i32
  }
}

</mosaic_0001>

<llo_original>
// kernel: tpu_custom_call.1
$region0: #{tpu_custom_call.1}
  #allocation0 [shape = 'u32[]', space=smem, size = 0x4, offset = 0x4, fixed_abs, tag = 'smem constant byte address 0x4 - core index']
  #allocation1 [shape = 'u32[144,128]{1,0:T(1,128)}', space=vmem, size = 0x12000, scoped, tag = 'internal scratch']
  %s0 = inlined_call_operand.vmem [shape: f32[16,128], index: 0, kind: input, shape index: {}]
  %s1 = inlined_call_operand.vmem [shape: s32[16,1], index: 1, kind: input, shape index: {}]
  %s2 = inlined_call_operand.vmem [shape: f32[8,128], index: 2, kind: input, shape index: {}]
  %s3 = inlined_call_operand.hbm [shape: f32[1,128], index: 3, kind: input, shape index: {}]
  %s4 = inlined_call_operand.vmem [shape: f32[8,128], index: 4, kind: input, shape index: {}]
  %s5 = inlined_call_operand.vmem [shape: f32[1,128], index: 5, kind: input, shape index: {}]
  %s6 = inlined_call_operand.hbm [shape: f32[16,128], index: 6, kind: output, shape index: {}]
  %s7 = sld [smem:[#allocation0]]
  $region61: #{tpu_custom_call.1} parent=0
    _
  %s9 = ssub.s32 1, %s7
  %s10 = scalar_select 0, %s9, %s7
  $region1: #{tpu_custom_call.1} parent=0
    #allocation2 [shape = 'u8[512]{0}', space=vmem, size = 0x400, scoped, tag = 'input window, operand 3, single buffered']
    #allocation3 [shape = 's32[2]{0}', space=sflag, size = 0x8, scoped, tag = 'scoped memory for tpu_custom_call.1']
    #allocation4 [shape = 's32[2]{0}', space=sflag, size = 0x8, scoped, tag = 'scoped memory for tpu_custom_call.1']
    #allocation5 [shape = 'u8[8192]{0}', space=vmem, size = 0x2000, scoped, tag = 'output window, operand 0']
    %11 = vsyncpa [#allocation3], 0
    %12 = vsyncpa [#allocation4], 0
    %s13 = scalar_lea.sflag [#allocation4], 1
    %14 = vsyncpa %s13, 0
    loop: start=0, step=1, limit=4
    $region2: #{tpu_custom_call.1} parent=1 // loop_pre_header
      _
    $region3: #{tpu_custom_call.1} parent=1 // loop_header
      %s16 = sphi 0, %s20
      %p17 = scmp.ge.s32.totalorder %s16, 4
      %s26 = sphi 0, %s28
      %s29 = sphi 0, %s26
      %s30 = sphi 0, %s29
      %s46 = sphi 0, %s30
      %s52 = sphi 0, %s54
      %s55 = sphi 0, %s52
      %s56 = sphi 0, %s55
      %s72 = sphi 0, %s56
      %s76 = sphi 0, %s76
      %s78 = sphi 0, %s76
      %s79 = sphi 0, %s78
      %s93 = sphi 0, %s79
      %s97 = sphi 0, %s97
      %s99 = sphi 0, %s97
      %s100 = sphi 0, %s99
      %s114 = sphi 0, %s100
      %s118 = sphi 0, %s118
      %s120 = sphi 0, %s118
      %s121 = sphi 0, %s120
      %s135 = sphi 0, %s121
      %s139 = sphi 0, %s139
      %s141 = sphi 0, %s139
      %s142 = sphi 0, %s141
      %s156 = sphi 0, %s142
      %s162 = sphi 0, %s164
      %s165 = sphi 0, %s162
      %s166 = sphi 0, %s165
      %s182 = sphi 0, %s166
    $region4: #{tpu_custom_call.1} parent=1 // loop_header_branch
      %19 = sbr.rel (%p17) target = $region8
    $region5: #{tpu_custom_call.1} parent=1 // loop_body
      %s21 = ssub.s32 %s16, 1
      %s22 = ssub.s32 %s16, 2
      %s23 = sadd.s32 %s16, 1
      %s24 = ssub.s32 %s16, %s23
      %p25 = scmp.eq.s32.totalorder %s24, 0
      %s27 = sadd.s32 %s26, 1
      %s28 = scalar_select %p25, %s26, %s27
      %p31 = pneg %p25
      %p32 = scmp.eq.s32.totalorder %s16, 1
      %p33 = por %p31, %p32
      %p34 = scmp.ne.s32.totalorder %s26, %s29
      %p35 = scmp.eq.s32.totalorder %s16, 0
      %p36 = por %p34, %p35
      %p37 = scmp.ne.s32.totalorder %s26, %s29
      %p38 = scmp.eq.s32.totalorder %s21, 1
      %p39 = por %p37, %p38
      %p40 = scmp.ne.s32.totalorder %s29, %s30
      %p41 = scmp.eq.s32.totalorder %s21, 0
      %p42 = por %p40, %p41
      %p43 = scmp.ne.s32.totalorder %s29, %s30
      %p44 = scmp.eq.s32.totalorder %s22, 1
      %p45 = por %p43, %p44
      %p47 = scmp.ne.s32.totalorder %s30, %s46
      %p48 = scmp.eq.s32.totalorder %s22, 0
      %p49 = por %p47, %p48
      %s50 = ssub.s32 %s16, %s23
      %p51 = scmp.eq.s32.totalorder %s50, 0
      %s53 = sadd.s32 %s52, 1
      %s54 = scalar_select %p51, %s52, %s53
      %p57 = pneg %p51
      %p58 = scmp.eq.s32.totalorder %s16, 1
      %p59 = por %p57, %p58
      %p60 = scmp.ne.s32.totalorder %s52, %s55
      %p61 = scmp.eq.s32.totalorder %s16, 0
      %p62 = por %p60, %p61
      %p63 = scmp.ne.s32.totalorder %s52, %s55
      %p64 = scmp.eq.s32.totalorder %s21, 1
      %p65 = por %p63, %p64
      %p66 = scmp.ne.s32.totalorder %s55, %s56
      %p67 = scmp.eq.s32.totalorder %s21, 0
      %p68 = por %p66, %p67
      %p69 = scmp.ne.s32.totalorder %s55, %s56
      %p70 = scmp.eq.s32.totalorder %s22, 1
      %p71 = por %p69, %p70
      %p73 = scmp.ne.s32.totalorder %s56, %s72
      %p74 = scmp.eq.s32.totalorder %s22, 0
      %p75 = por %p73, %p74
      %s77 = sadd.s32 %s76, 1
      %p80 = scmp.eq.s32.totalorder %s16, 1
      %p81 = scmp.ne.s32.totalorder %s76, %s78
      %p82 = scmp.eq.s32.totalorder %s16, 0
      %p83 = por %p81, %p82
      %p84 = scmp.ne.s32.totalorder %s76, %s78
      %p85 = scmp.eq.s32.totalorder %s21, 1
      %p86 = por %p84, %p85
      %p87 = scmp.ne.s32.totalorder %s78, %s79
      %p88 = scmp.eq.s32.totalorder %s21, 0
      %p89 = por %p87, %p88
      %p90 = scmp.ne.s32.totalorder %s78, %s79
      %p91 = scmp.eq.s32.totalorder %s22, 1
      %p92 = por %p90, %p91
      %p94 = scmp.ne.s32.totalorder %s79, %s93
      %p95 = scmp.eq.s32.totalorder %s22, 0
      %p96 = por %p94, %p95
      %s98 = sadd.s32 %s97, 1
      %p101 = scmp.eq.s32.totalorder %s16, 1
      %p102 = scmp.ne.s32.totalorder %s97, %s99
      %p103 = scmp.eq.s32.totalorder %s16, 0
      %p104 = por %p102, %p103
      %p105 = scmp.ne.s32.totalorder %s97, %s99
      %p106 = scmp.eq.s32.totalorder %s21, 1
      %p107 = por %p105, %p106
      %p108 = scmp.ne.s32.totalorder %s99, %s100
      %p109 = scmp.eq.s32.totalorder %s21, 0
      %p110 = por %p108, %p109
      %p111 = scmp.ne.s32.totalorder %s99, %s100
      %p112 = scmp.eq.s32.totalorder %s22, 1
      %p113 = por %p111, %p112
      %p115 = scmp.ne.s32.totalorder %s100, %s114
      %p116 = scmp.eq.s32.totalorder %s22, 0
      %p117 = por %p115, %p116
      %s119 = sadd.s32 %s118, 1
      %p122 = scmp.eq.s32.totalorder %s16, 1
      %p123 = scmp.ne.s32.totalorder %s118, %s120
      %p124 = scmp.eq.s32.totalorder %s16, 0
      %p125 = por %p123, %p124
      %p126 = scmp.ne.s32.totalorder %s118, %s120
      %p127 = scmp.eq.s32.totalorder %s21, 1
      %p128 = por %p126, %p127
      %p129 = scmp.ne.s32.totalorder %s120, %s121
      %p130 = scmp.eq.s32.totalorder %s21, 0
      %p131 = por %p129, %p130
      %p132 = scmp.ne.s32.totalorder %s120, %s121
      %p133 = scmp.eq.s32.totalorder %s22, 1
      %p134 = por %p132, %p133
      %p136 = scmp.ne.s32.totalorder %s121, %s135
      %p137 = scmp.eq.s32.totalorder %s22, 0
      %p138 = por %p136, %p137
      %s140 = sadd.s32 %s139, 1
      %p143 = scmp.eq.s32.totalorder %s16, 1
      %p144 = scmp.ne.s32.totalorder %s139, %s141
      %p145 = scmp.eq.s32.totalorder %s16, 0
      %p146 = por %p144, %p145
      %p147 = scmp.ne.s32.totalorder %s139, %s141
      %p148 = scmp.eq.s32.totalorder %s21, 1
      %p149 = por %p147, %p148
      %p150 = scmp.ne.s32.totalorder %s141, %s142
      %p151 = scmp.eq.s32.totalorder %s21, 0
      %p152 = por %p150, %p151
      %p153 = scmp.ne.s32.totalorder %s141, %s142
      %p154 = scmp.eq.s32.totalorder %s22, 1
      %p155 = por %p153, %p154
      %p157 = scmp.ne.s32.totalorder %s142, %s156
      %p158 = scmp.eq.s32.totalorder %s22, 0
      %p159 = por %p157, %p158
      %s160 = ssub.s32 %s16, %s23
      %p161 = scmp.eq.s32.totalorder %s160, 0
      %s163 = sadd.s32 %s162, 1
      %s164 = scalar_select %p161, %s162, %s163
      %p167 = pneg %p161
      %p168 = scmp.eq.s32.totalorder %s16, 1
      %p169 = por %p167, %p168
      %p170 = scmp.ne.s32.totalorder %s162, %s165
      %p171 = scmp.eq.s32.totalorder %s16, 0
      %p172 = por %p170, %p171
      %p173 = scmp.ne.s32.totalorder %s162, %s165
      %p174 = scmp.eq.s32.totalorder %s21, 1
      %p175 = por %p173, %p174
      %p176 = scmp.ne.s32.totalorder %s165, %s166
      %p177 = scmp.eq.s32.totalorder %s21, 0
      %p178 = por %p176, %p177
      %p179 = scmp.ne.s32.totalorder %s165, %s166
      %p180 = scmp.eq.s32.totalorder %s22, 1
      %p181 = por %p179, %p180
      %p183 = scmp.ne.s32.totalorder %s166, %s182
      %p184 = scmp.eq.s32.totalorder %s22, 0
      %p185 = por %p183, %p184
      %p186 = scmp.le.s32.totalorder 1, %s16
      %p187 = scmp.lt.s32.totalorder %s16, 3
      %p188 = pnand %p186, %p187
      %p189 = pneg %p188
      // Predicated region
      $region9: #{tpu_custom_call.1} parent=5 // pred_check
        _
      $region10: #{tpu_custom_call.1} parent=5 // pred_check_branch
        %191 = sbr.rel (%p188) target = $region12
      $region11: #{tpu_custom_call.1} parent=5 // pred_region
        %s192 = ssub.s32 %s16, 1
        // Predicated region
        $region13: #{tpu_custom_call.1} parent=11 // pred_check
          %p193 = pneg %p89
        $region14: #{tpu_custom_call.1} parent=11 // pred_check_branch
          %195 = sbr.rel (%p193) target = $region16
        $region15: #{tpu_custom_call.1} parent=11 // pred_region
          _
        $region16: #{tpu_custom_call.1} parent=11 // pred_fallthru
          _
        // Predicated region
        $region17: #{tpu_custom_call.1} parent=11 // pred_check
          %p196 = pneg %p110
        $region18: #{tpu_custom_call.1} parent=11 // pred_check_branch
          %198 = sbr.rel (%p196) target = $region20
        $region19: #{tpu_custom_call.1} parent=11 // pred_region
          %s200 = ssub.s32 16, 16
          %201 = vsyncadd [#allocation3], %s200
          %s203 = sshll.u32 [#allocation2], 4
          %s204 = int_to_ptr.vmem [resolvable:$true] %s203
          %206 = dma.hbm_to_vmem [thread:$0]  %s3, 16, %s204, [#allocation3]
        $region20: #{tpu_custom_call.1} parent=11 // pred_fallthru
          _
        // Predicated region
        $region21: #{tpu_custom_call.1} parent=11 // pred_check
          %p207 = pneg %p131
        $region22: #{tpu_custom_call.1} parent=11 // pred_check_branch
          %209 = sbr.rel (%p207) target = $region24
        $region23: #{tpu_custom_call.1} parent=11 // pred_region
          _
        $region24: #{tpu_custom_call.1} parent=11 // pred_fallthru
          _
        // Predicated region
        $region25: #{tpu_custom_call.1} parent=11 // pred_check
          %p210 = pneg %p152
        $region26: #{tpu_custom_call.1} parent=11 // pred_check_branch
          %212 = sbr.rel (%p210) target = $region28
        $region27: #{tpu_custom_call.1} parent=11 // pred_region
          _
        $region28: #{tpu_custom_call.1} parent=11 // pred_fallthru
          _
      $region12: #{tpu_custom_call.1} parent=5 // pred_fallthru
        _
      %p213 = scmp.lt.s32.totalorder %s16, 2
      // Predicated region
      $region29: #{tpu_custom_call.1} parent=5 // pred_check
        %p214 = pneg %p213
      $region30: #{tpu_custom_call.1} parent=5 // pred_check_branch
        %216 = sbr.rel (%p214) target = $region32
      $region31: #{tpu_custom_call.1} parent=5 // pred_region
        // Predicated region
        $region33: #{tpu_custom_call.1} parent=31 // pred_check
          %p217 = pneg %p36
        $region34: #{tpu_custom_call.1} parent=31 // pred_check_branch
          %219 = sbr.rel (%p217) target = $region36
        $region35: #{tpu_custom_call.1} parent=31 // pred_region
          %p220 = scmp.lt.s32.totalorder %s16, 1
          %s221 = scalar_select %p220, %s16, 1
          %s222 = smul.addr %s221, 8
          %s223 = scalar_lea.vmem %s0, %s222
        $region36: #{tpu_custom_call.1} parent=31 // pred_fallthru
          _
        // Predicated region
        $region37: #{tpu_custom_call.1} parent=31 // pred_check
          %p224 = pneg %p62
        $region38: #{tpu_custom_call.1} parent=31 // pred_check_branch
          %226 = sbr.rel (%p224) target = $region40
        $region39: #{tpu_custom_call.1} parent=31 // pred_region
          %p227 = scmp.lt.s32.totalorder %s16, 1
          %s228 = scalar_select %p227, %s16, 1
          %s229 = smul.addr %s228, 8
          %s230 = scalar_lea.vmem %s1, %s229
        $region40: #{tpu_custom_call.1} parent=31 // pred_fallthru
          _
      $region32: #{tpu_custom_call.1} parent=5 // pred_fallthru
        _
      %p231 = scmp.le.s32.totalorder 1, %s16
      %p232 = scmp.lt.s32.totalorder %s16, 3
      %p233 = pnand %p231, %p232
      %p234 = pneg %p233
      // Predicated region
      $region41: #{tpu_custom_call.1} parent=5 // pred_check
        _
      $region42: #{tpu_custom_call.1} parent=5 // pred_check_branch
        %236 = sbr.rel (%p233) target = $region44
      $region43: #{tpu_custom_call.1} parent=5 // pred_region
        %s237 = ssub.s32 %s16, 1
        // Predicated region
        $region45: #{tpu_custom_call.1} parent=43 // pred_check
          %p238 = pneg %p110
        $region46: #{tpu_custom_call.1} parent=43 // pred_check_branch
          %240 = sbr.rel (%p238) target = $region48
        $region47: #{tpu_custom_call.1} parent=43 // pred_region
          %241 = dma.done [#allocation3], 16
        $region48: #{tpu_custom_call.1} parent=43 // pred_fallthru
          _
        %p242 = scmp.lt.s32.totalorder %s21, 1
        %s243 = scalar_select %p242, %s21, 1
        %s244 = smul.addr %s243, 8
        %s245 = scalar_lea.vmem %s0, %s244
        %p246 = pneg %p42
        %p247 = pneg %p39
        %p248 = scmp.lt.s32.totalorder %s21, 1
        %s249 = scalar_select %p248, %s21, 1
        %s250 = smul.addr %s249, 8
        %s251 = scalar_lea.vmem %s1, %s250
        %p252 = pneg %p68
        %p253 = pneg %p65
        %p254 = pneg %p89
        %p255 = pneg %p86
        %p256 = pneg %p110
        %p257 = pneg %p107
        %p258 = pneg %p131
        %p259 = pneg %p128
        %p260 = pneg %p152
        %p261 = pneg %p149
        %p262 = pneg %p178
        %p263 = pneg %p175
        %s264 = sand.u32 %s165, 1
        %s265 = scalar_lea.sflag [#allocation4], %s264
        %s266 = sand.u32 %s165, 1
        %s267 = smul.addr %s266, 8
        %s268 = scalar_lea.vmem [#allocation5], %s267
        %p269 = scmp.lt.s32.totalorder %s21, 1
        %s270 = scalar_select %p269, %s21, 1
        %s271 = smul.addr %s270, 8
        %s272 = scalar_lea.vmem %s0, %s271
        %p273 = scmp.lt.s32.totalorder %s21, 1
        %s274 = scalar_select %p273, %s21, 1
        %s275 = smul.addr %s274, 8
        %s276 = scalar_lea.vmem %s1, %s275
        %v277 = vlaneseq
        %v278 = vand.u32 %v277, 127
        %v279 = vld [vmem:[%s276] sm:$0xff]
        %280 = vset.pattern.permute.xlu0 0
        %281 = vperm.xlu0 %280, %v279
        %v282 = vpop.permute.xlu0 %281
        %vm283 = vcmp.eq.s32.totalorder %v278, %v282
        %v284 = vsel %vm283, 1, 0
        %v285 = vcvt.s32.f32 %v284
        %v286 = vld [vmem:[%s2] sm:$0xff]
        %v287 = vld [vmem:[#allocation2] sm:$0x1]
        %v289 = vlaneseq
        %v290 = vshrl.u32 %v289, 7
        %v291 = vsub.s32 0, %v290
        %v292 = vrot.slane %v287, %v291
        %vm294 = vcmask 64512
        %v296 = vsel %vm294, %v285, 0
        %298 = vmatprep.subr.mxu0 0.0
        %299 = vmatpush1.msra.mxu0 %v286
        %300 = vmatprep.subr.mxu0 0.0
        %301 = vmatpush1.msra.mxu0 0.0
        %302 = vmatprep.subr.mxu0 0.0
        %303 = vmatpush1.msra.mxu0 0.0
        %304 = vmatprep.subr.mxu0 0.0
        %305 = vmatpush1.msra.mxu0 0.0
        %306 = vmatprep.subr.mxu0 0.0
        %307 = vmatpush1.msra.mxu0 0.0
        %308 = vmatprep.subr.mxu0 0.0
        %309 = vmatpush1.msra.mxu0 0.0
        %310 = vmatprep.subr.mxu0 0.0
        %311 = vmatpush1.msra.mxu0 0.0
        %312 = vmatprep.subr.mxu0 0.0
        %313 = vmatpush1.msra.mxu0 0.0
        %314 = vmatprep.subr.mxu0 0.0
        %315 = vmatpush1.msra.mxu0 0.0
        %316 = vmatprep.subr.mxu0 0.0
        %317 = vmatpush1.msra.mxu0 0.0
        %318 = vmatprep.subr.mxu0 0.0
        %319 = vmatpush1.msra.mxu0 0.0
        %320 = vmatprep.subr.mxu0 0.0
        %321 = vmatpush1.msra.mxu0 0.0
        %322 = vmatprep.subr.mxu0 0.0
        %323 = vmatpush1.msra.mxu0 0.0
        %324 = vmatprep.subr.mxu0 0.0
        %325 = vmatpush1.msra.mxu0 0.0
        %326 = vmatprep.subr.mxu0 0.0
        %327 = vmatpush1.msra.mxu0 0.0
        %328 = vmatprep.subr.mxu0 0.0
        %329 = vmatpush1.msra.mxu0 0.0
        %330 = vmatprep.subr.mxu0 0.0
        %331 = vmatpush1.msra.mxu0 0.0
        %332 = vmatprep.subr.mxu0 0.0
        %333 = vmatpush1.msra.mxu0 0.0
        %334 = vmatprep.subr.mxu0 0.0
        %335 = vmatpush1.msra.mxu0 0.0
        %336 = vmatprep.subr.mxu0 0.0
        %337 = vmatpush1.msra.mxu0 0.0
        %338 = vmatprep.subr.mxu0 0.0
        %339 = vmatpush1.msra.mxu0 0.0
        %340 = vmatprep.subr.mxu0 0.0
        %341 = vmatpush1.msra.mxu0 0.0
        %342 = vmatprep.subr.mxu0 0.0
        %343 = vmatpush1.msra.mxu0 0.0
        %344 = vmatprep.subr.mxu0 0.0
        %345 = vmatpush1.msra.mxu0 0.0
        %346 = vmatprep.subr.mxu0 0.0
        %347 = vmatpush1.msra.mxu0 0.0
        %348 = vmatprep.subr.mxu0 0.0
        %349 = vmatpush1.msra.mxu0 0.0
        %350 = vmatprep.subr.mxu0 0.0
        %351 = vmatpush1.msra.mxu0 0.0
        %352 = vmatprep.subr.mxu0 0.0
        %353 = vmatpush1.msra.mxu0 0.0
        %354 = vmatprep.subr.mxu0 0.0
        %355 = vmatpush1.msra.mxu0 0.0
        %356 = vmatprep.subr.mxu0 0.0
        %357 = vmatpush1.msra.mxu0 0.0
        %358 = vmatprep.subr.mxu0 0.0
        %359 = vmatpush1.msra.mxu0 0.0
        %360 = vmatprep.subr.mxu0 0.0
        %361 = vmatpush1.msra.mxu0 0.0
        %362 = vmatprep.mubr.f32.mxu0 0.0
        %363 = vmatmul.mubr.f32.gmra.mrb[0].mxu0 %v296
        %v364 = vpop.f32.mrb[0].mxu0
        %v365 = vadd.f32 %v292, %v364
        %v366 = vpop.f32.mrb[0].mxu0
        %367 = vdwg.mxu0
        %v368 = vld [vmem:[%s4] sm:$0xff]
        %v369 = vld [vmem:[%s5] sm:$0x1]
        %v371 = vlaneseq
        %v372 = vshrl.u32 %v371, 7
        %v373 = vsub.s32 0, %v372
        %v374 = vrot.slane %v369, %v373
        %376 = vmatprep.subr.mxu0 0.0
        %377 = vmatpush1.msra.mxu0 %v368
        %378 = vmatprep.subr.mxu0 0.0
        %379 = vmatpush1.msra.mxu0 0.0
        %380 = vmatprep.subr.mxu0 0.0
        %381 = vmatpush1.msra.mxu0 0.0
        %382 = vmatprep.subr.mxu0 0.0
        %383 = vmatpush1.msra.mxu0 0.0
        %384 = vmatprep.subr.mxu0 0.0
        %385 = vmatpush1.msra.mxu0 0.0
        %386 = vmatprep.subr.mxu0 0.0
        %387 = vmatpush1.msra.mxu0 0.0
        %388 = vmatprep.subr.mxu0 0.0
        %389 = vmatpush1.msra.mxu0 0.0
        %390 = vmatprep.subr.mxu0 0.0
        %391 = vmatpush1.msra.mxu0 0.0
        %392 = vmatprep.subr.mxu0 0.0
        %393 = vmatpush1.msra.mxu0 0.0
        %394 = vmatprep.subr.mxu0 0.0
        %395 = vmatpush1.msra.mxu0 0.0
        %396 = vmatprep.subr.mxu0 0.0
        %397 = vmatpush1.msra.mxu0 0.0
        %398 = vmatprep.subr.mxu0 0.0
        %399 = vmatpush1.msra.mxu0 0.0
        %400 = vmatprep.subr.mxu0 0.0
        %401 = vmatpush1.msra.mxu0 0.0
        %402 = vmatprep.subr.mxu0 0.0
        %403 = vmatpush1.msra.mxu0 0.0
        %404 = vmatprep.subr.mxu0 0.0
        %405 = vmatpush1.msra.mxu0 0.0
        %406 = vmatprep.subr.mxu0 0.0
        %407 = vmatpush1.msra.mxu0 0.0
        %408 = vmatprep.subr.mxu0 0.0
        %409 = vmatpush1.msra.mxu0 0.0
        %410 = vmatprep.subr.mxu0 0.0
        %411 = vmatpush1.msra.mxu0 0.0
        %412 = vmatprep.subr.mxu0 0.0
        %413 = vmatpush1.msra.mxu0 0.0
        %414 = vmatprep.subr.mxu0 0.0
        %415 = vmatpush1.msra.mxu0 0.0
        %416 = vmatprep.subr.mxu0 0.0
        %417 = vmatpush1.msra.mxu0 0.0
        %418 = vmatprep.subr.mxu0 0.0
        %419 = vmatpush1.msra.mxu0 0.0
        %420 = vmatprep.subr.mxu0 0.0
        %421 = vmatpush1.msra.mxu0 0.0
        %422 = vmatprep.subr.mxu0 0.0
        %423 = vmatpush1.msra.mxu0 0.0
        %424 = vmatprep.subr.mxu0 0.0
        %425 = vmatpush1.msra.mxu0 0.0
        %426 = vmatprep.subr.mxu0 0.0
        %427 = vmatpush1.msra.mxu0 0.0
        %428 = vmatprep.subr.mxu0 0.0
        %429 = vmatpush1.msra.mxu0 0.0
        %430 = vmatprep.subr.mxu0 0.0
        %431 = vmatpush1.msra.mxu0 0.0
        %432 = vmatprep.subr.mxu0 0.0
        %433 = vmatpush1.msra.mxu0 0.0
        %434 = vmatprep.subr.mxu0 0.0
        %435 = vmatpush1.msra.mxu0 0.0
        %436 = vmatprep.subr.mxu0 0.0
        %437 = vmatpush1.msra.mxu0 0.0
        %438 = vmatprep.subr.mxu0 0.0
        %439 = vmatpush1.msra.mxu0 0.0
        %440 = vmatprep.mubr.f32.mxu0 0.0
        %441 = vmatmul.mubr.f32.gmra.mrb[0].mxu0 %v296
        %v442 = vpop.f32.mrb[0].mxu0
        %v443 = vadd.f32 %v374, %v442
        %v444 = vpop.f32.mrb[0].mxu0
        %445 = vdwg.mxu0
        %v446 = vld [vmem:[%s272] sm:$0xff]
        %v447 = vmul.f32 %v446, %v365
        %v448 = vadd.f32 %v447, %v443
        %v449 = vmax.f32 %v448, 0.0
        %450 = vst [vmem:[%s268] sm:$0xff] %v449
        %s451 = sand.u32 %s165, 1
        %s452 = scalar_lea.sflag [#allocation4], %s451
        %s453 = sand.u32 %s165, 1
        %s454 = smul.addr %s453, 8
        %s455 = scalar_lea.vmem [#allocation5], %s454
        // Predicated region
        $region49: #{tpu_custom_call.1} parent=43 // pred_check
          %p456 = pneg %p175
        $region50: #{tpu_custom_call.1} parent=43 // pred_check_branch
          %458 = sbr.rel (%p456) target = $region52
        $region51: #{tpu_custom_call.1} parent=43 // pred_region
          %s460 = ssub.s32 128, 128
          %461 = vsyncadd %s452, %s460
          %s462 = smul.addr %s21, 128
          %s463 = scalar_lea.hbm %s6, %s462
          %s465 = sshll.u32 %s455, 4
          %s466 = int_to_ptr.vmem [resolvable:$true] %s465
          %468 = dma.vmem_to_hbm [thread:$0]  %s466, 128, %s463, %s452
        $region52: #{tpu_custom_call.1} parent=43 // pred_fallthru
          _
      $region44: #{tpu_custom_call.1} parent=5 // pred_fallthru
        _
      %p469 = scmp.le.s32.totalorder 2, %s16
      // Predicated region
      $region53: #{tpu_custom_call.1} parent=5 // pred_check
        %p470 = pneg %p469
      $region54: #{tpu_custom_call.1} parent=5 // pred_check_branch
        %472 = sbr.rel (%p470) target = $region56
      $region55: #{tpu_custom_call.1} parent=5 // pred_region
        %s473 = ssub.s32 %s16, 2
        // Predicated region
        $region57: #{tpu_custom_call.1} parent=55 // pred_check
          %p474 = pneg %p181
        $region58: #{tpu_custom_call.1} parent=55 // pred_check_branch
          %476 = sbr.rel (%p474) target = $region60
        $region59: #{tpu_custom_call.1} parent=55 // pred_region
          %s477 = sand.u32 %s166, 1
          %s478 = scalar_lea.sflag [#allocation4], %s477
          %s479 = sand.u32 %s166, 1
          %s480 = smul.addr %s479, 8
          %s481 = scalar_lea.vmem [#allocation5], %s480
          %482 = dma.done %s478, 128
        $region60: #{tpu_custom_call.1} parent=55 // pred_fallthru
          _
      $region56: #{tpu_custom_call.1} parent=5 // pred_fallthru
        _
    $region6: #{tpu_custom_call.1} parent=1 // loop_footer
      %s20 = sadd.s32 1, %s16
    $region7: #{tpu_custom_call.1} parent=1 // loop_footer_branch
      %15 = sbr.rel target = $region3
    $region8: #{tpu_custom_call.1} parent=1 // loop_exit
      _
    %483 = vsyncpa [#allocation3], 1
    %s484 = scalar_lea.sflag [#allocation3], 1
    %485 = vsyncpa %s484, 1
    %486 = vsyncpa [#allocation4], 1
    %s487 = scalar_lea.sflag [#allocation4], 1
    %488 = vsyncpa %s487, 1

</llo_original>
